<compile_context>
chip_gen: v7x
topology: tpu7x:2x2x1
jax: 0.10.0
libtpu: 0.0.40
codegen_flags: <defaults>
</compile_context>

<pallas_src>
import functools

import jax
import jax.numpy as jnp
from jax.experimental import pallas as pl
from jax.experimental.pallas import tpu as pltpu


def _round_up(n, m):
    return ((n + m - 1) // m) * m


def _embedding_kernel(emb_ref, wp_ref, wgt0_ref, bgt0_ref, wgt1_ref, bgt1_ref,
                      o_ref, *, hidden):
    # projection: (rt, E) @ (E, H) -> (rt, H), no bias, f32 accumulation.
    h = jnp.dot(emb_ref[...], wp_ref[...], preferred_element_type=jnp.float32)

    # Two highway layers; gate & transform weights are pre-concatenated into a
    # single (H, 2H) matrix per layer -> one matmul per layer instead of two.
    for wgt_ref, bgt_ref in ((wgt0_ref, bgt0_ref), (wgt1_ref, bgt1_ref)):
        gt = jnp.dot(h.astype(wgt_ref.dtype), wgt_ref[...],
                     preferred_element_type=jnp.float32) + bgt_ref[...]
        g = jax.nn.sigmoid(gt[:, :hidden])          # gate half
        t = jnp.maximum(gt[:, hidden:], 0.0)        # transform half (relu)
        h = g * t + (1.0 - g) * h

    o_ref[...] = h.astype(o_ref.dtype)
    # TODO(synk): optional lane-dense (rt//4, 4H) store reshape for v5e skipped
    # to keep lowering simple; output tile is (rt, H).


def prepare_params(params, compute_dtype=jnp.bfloat16):
    """One-time parameter prep: fuse gate|transform weights and cast dtypes.

    Call this once (outside any per-step loop); `embedding_forward` consumes
    the fused parameters.
    """
    fused = {"w_proj": params["w_proj"].astype(compute_dtype)}
    for l in (0, 1):
        fused[f"w_gt{l}"] = jnp.concatenate(
            [params[f"w_gate{l}"], params[f"w_trans{l}"]], axis=1
        ).astype(compute_dtype)
        # Biases stay f32 (tiny; added to the f32 accumulator).
        fused[f"b_gt{l}"] = jnp.concatenate(
            [params[f"b_gate{l}"], params[f"b_trans{l}"]], axis=1
        ).astype(jnp.float32)
    return fused


@functools.partial(jax.jit, static_argnames=("row_tile",))
def embedding_forward(x, word_vectors, fused_params, row_tile=256):
    """Forward pass of the Embedding module (eval mode, so dropout = identity)."""
    B, S = x.shape
    V, E = word_vectors.shape
    E2, H = fused_params["w_proj"].shape
    assert E2 == E
    compute_dtype = fused_params["w_proj"].dtype

    n_rows = B * S
    # Big row tile (amortizes ~0.35us/step overhead, feeds the MXU a full M),
    # but never larger than the (8-aligned) number of rows; pad rows to a
    # multiple of the tile instead of asserting divisibility.
    rt = _round_up(min(row_tile, n_rows), 8)
    n_pad = _round_up(n_rows, rt)

    ids = x.reshape(-1).astype(jnp.int32)
    if n_pad != n_rows:
        ids = jnp.pad(ids, (0, n_pad - n_rows))

    # --- glue: embedding lookup (gather) + cast.  allow_input_fusion on this
    # operand lets XLA fuse the gather/cast into the kernel's input stream so
    # the gathered rows need not round-trip through HBM.
    emb = jnp.take(word_vectors, ids, axis=0).astype(compute_dtype)  # (n_pad, E)
    # TODO(synk): F.dropout skipped (module is evaluated in inference mode).

    grid = (n_pad // rt,)

    def row_map(i):
        return (i, 0)

    def full_map(i):
        return (0, 0)

    out = pl.pallas_call(
        functools.partial(_embedding_kernel, hidden=H),
        out_shape=jax.ShapeDtypeStruct((n_pad, H), jnp.float32),
        grid_spec=pltpu.PrefetchScalarGridSpec(
            num_scalar_prefetch=0,
            grid=grid,
            in_specs=[
                pl.BlockSpec((rt, E), row_map),       # gathered embedding rows
                pl.BlockSpec((E, H), full_map),       # projection weight
                pl.BlockSpec((H, 2 * H), full_map),   # fused gate|trans W, layer 0
                pl.BlockSpec((1, 2 * H), full_map),   # fused gate|trans b, layer 0
                pl.BlockSpec((H, 2 * H), full_map),   # fused gate|trans W, layer 1
                pl.BlockSpec((1, 2 * H), full_map),   # fused gate|trans b, layer 1
            ],
            out_specs=pl.BlockSpec((rt, H), row_map),
        ),
        compiler_params=pltpu.CompilerParams(
            dimension_semantics=("parallel",),
            allow_input_fusion=[True, False, False, False, False, False],
        ),
    )(emb,
      fused_params["w_proj"],
      fused_params["w_gt0"], fused_params["b_gt0"],
      fused_params["w_gt1"], fused_params["b_gt1"])

    if n_pad != n_rows:
        out = out[:n_rows]
    return out.reshape(B, S, H)


def reference_forward(x, word_vectors, params):
    """Pure-JAX f32 reference reproducing the PyTorch forward semantics."""
    emb = jnp.take(word_vectors, x.reshape(-1), axis=0)
    h = emb @ params["w_proj"]
    for l in (0, 1):
        g = jax.nn.sigmoid(h @ params[f"w_gate{l}"] + params[f"b_gate{l}"])
        t = jax.nn.relu(h @ params[f"w_trans{l}"] + params[f"b_trans{l}"])
        h = g * t + (1.0 - g) * h
    return h.reshape(x.shape[0], x.shape[1], -1)


if __name__ == "__main__":
    # Small synthetic shapes implied by the module:
    B, S = 2, 8          # batch, sequence length of token ids
    V, E = 100, 64       # vocab size, word-vector dim
    H = 32               # hidden_size

    key = jax.random.PRNGKey(0)
    (k_wv, k_x, k_p, k_g0, k_t0, k_g1, k_t1,
     k_bg0, k_bt0, k_bg1, k_bt1) = jax.random.split(key, 11)

    word_vectors = jax.random.normal(k_wv, (V, E), dtype=jnp.float32)
    x = jax.random.randint(k_x, (B, S), 0, V, dtype=jnp.int32)

    scale = 0.1
    params = {
        # proj: Linear(E, H, bias=False); stored as (in, out)
        "w_proj": scale * jax.random.normal(k_p, (E, H), dtype=jnp.float32),
        # highway layer 0
        "w_gate0": scale * jax.random.normal(k_g0, (H, H), dtype=jnp.float32),
        "b_gate0": scale * jax.random.normal(k_bg0, (1, H), dtype=jnp.float32),
        "w_trans0": scale * jax.random.normal(k_t0, (H, H), dtype=jnp.float32),
        "b_trans0": scale * jax.random.normal(k_bt0, (1, H), dtype=jnp.float32),
        # highway layer 1
        "w_gate1": scale * jax.random.normal(k_g1, (H, H), dtype=jnp.float32),
        "b_gate1": scale * jax.random.normal(k_bg1, (1, H), dtype=jnp.float32),
        "w_trans1": scale * jax.random.normal(k_t1, (H, H), dtype=jnp.float32),
        "b_trans1": scale * jax.random.normal(k_bt1, (1, H), dtype=jnp.float32),
    }

    ref = reference_forward(x, word_vectors, params)

    # Exact-semantics check: f32 compute path, tight tolerance.
    fp32_params = prepare_params(params, compute_dtype=jnp.float32)
    out_f32 = jax.block_until_ready(embedding_forward(x, word_vectors, fp32_params))
    assert out_f32.shape == (B, S, H), out_f32.shape
    assert jnp.allclose(out_f32, ref, atol=1e-5, rtol=1e-5), \
        float(jnp.max(jnp.abs(out_f32 - ref)))

    # Fast path: bf16 inputs with f32 MXU accumulation, looser tolerance.
    bf16_params = prepare_params(params, compute_dtype=jnp.bfloat16)
    out_bf16 = jax.block_until_ready(embedding_forward(x, word_vectors, bf16_params))
    assert out_bf16.shape == (B, S, H), out_bf16.shape
    assert jnp.allclose(out_bf16, ref, atol=3e-2, rtol=3e-2), \
        float(jnp.max(jnp.abs(out_bf16 - ref)))

    print("KERNEL_OK")
</pallas_src>

<mosaic_0001>
module attributes {stable_mosaic.version = 11 : i64} {
  func.func @_embedding_kernel(%arg0: i32, %arg1: memref<16x64xf32, #tpu.memory_space<vmem>>, %arg2: memref<64x32xf32, #tpu.memory_space<vmem>>, %arg3: memref<32x64xf32, #tpu.memory_space<vmem>>, %arg4: memref<1x64xf32, #tpu.memory_space<vmem>>, %arg5: memref<32x64xf32, #tpu.memory_space<vmem>>, %arg6: memref<1x64xf32, #tpu.memory_space<vmem>>, %arg7: memref<16x32xf32, #tpu.memory_space<vmem>>) attributes {dimension_semantics = [#tpu.dimension_semantics<parallel>], iteration_bounds = array<i64: 1>, scalar_prefetch = 0 : i64, scratch_operands = 0 : i64, tpu.core_type = #tpu.core_type<tc>, window_params = [{transform_indices = @transform_0, window_bounds = array<i64: 16, 64>}, {pipeline_mode = #tpu.pipeline_mode<synchronous>, transform_indices = @transform_1, window_bounds = array<i64: 64, 32>}, {pipeline_mode = #tpu.pipeline_mode<synchronous>, transform_indices = @transform_2, window_bounds = array<i64: 32, 64>}, {pipeline_mode = #tpu.pipeline_mode<synchronous>, transform_indices = @transform_3, window_bounds = array<i64: 1, 64>}, {pipeline_mode = #tpu.pipeline_mode<synchronous>, transform_indices = @transform_4, window_bounds = array<i64: 32, 64>}, {pipeline_mode = #tpu.pipeline_mode<synchronous>, transform_indices = @transform_5, window_bounds = array<i64: 1, 64>}, {transform_indices = @transform_6, window_bounds = array<i64: 16, 32>}]} {
    %c0 = arith.constant 0 : index
    %c0_0 = arith.constant 0 : index
    %0 = vector.load %arg1[%c0, %c0_0] : memref<16x64xf32, #tpu.memory_space<vmem>>, vector<16x64xf32>
    %c0_1 = arith.constant 0 : index
    %c0_2 = arith.constant 0 : index
    %1 = vector.load %arg2[%c0_1, %c0_2] : memref<64x32xf32, #tpu.memory_space<vmem>>, vector<64x32xf32>
    %cst = arith.constant dense<0.000000e+00> : vector<16x32xf32>
    %2 = tpu.matmul %0, %1, %cst {dimension_numbers = #tpu.dot_dimension_numbers<[1], [0], [0], [1], [0, 0, 1, 1], [], []>} : vector<16x64xf32>, vector<64x32xf32>, vector<16x32xf32> -> vector<16x32xf32>
    %c0_3 = arith.constant 0 : index
    %c0_4 = arith.constant 0 : index
    %3 = vector.load %arg3[%c0_3, %c0_4] : memref<32x64xf32, #tpu.memory_space<vmem>>, vector<32x64xf32>
    %cst_5 = arith.constant dense<0.000000e+00> : vector<16x64xf32>
    %4 = tpu.matmul %2, %3, %cst_5 {dimension_numbers = #tpu.dot_dimension_numbers<[1], [0], [0], [1], [0, 0, 1, 1], [], []>} : vector<16x32xf32>, vector<32x64xf32>, vector<16x64xf32> -> vector<16x64xf32>
    %c0_6 = arith.constant 0 : index
    %c0_7 = arith.constant 0 : index
    %5 = vector.load %arg4[%c0_6, %c0_7] : memref<1x64xf32, #tpu.memory_space<vmem>>, vector<1x64xf32>
    %6 = vector.broadcast %5 : vector<1x64xf32> to vector<16x64xf32>
    %7 = arith.addf %4, %6 : vector<16x64xf32>
    %8 = vector.extract_strided_slice %7 {offsets = [0, 0], sizes = [16, 32], strides = [1, 1]} : vector<16x64xf32> to vector<16x32xf32>
    %9 = arith.negf %8 : vector<16x32xf32>
    %10 = math.exp %9 : vector<16x32xf32>
    %cst_8 = arith.constant 1.000000e+00 : f32
    %11 = vector.broadcast %cst_8 : f32 to vector<16x32xf32>
    %12 = arith.addf %11, %10 : vector<16x32xf32>
    %13 = arith.divf %11, %12 : vector<16x32xf32>
    %14 = vector.extract_strided_slice %7 {offsets = [0, 32], sizes = [16, 32], strides = [1, 1]} : vector<16x64xf32> to vector<16x32xf32>
    %cst_9 = arith.constant 0.000000e+00 : f32
    %15 = vector.broadcast %cst_9 : f32 to vector<16x32xf32>
    %16 = arith.maximumf %14, %15 : vector<16x32xf32>
    %17 = arith.mulf %13, %16 : vector<16x32xf32>
    %cst_10 = arith.constant 1.000000e+00 : f32
    %18 = vector.broadcast %cst_10 : f32 to vector<16x32xf32>
    %19 = arith.subf %18, %13 : vector<16x32xf32>
    %20 = arith.mulf %19, %2 : vector<16x32xf32>
    %21 = arith.addf %17, %20 : vector<16x32xf32>
    %c0_11 = arith.constant 0 : index
    %c0_12 = arith.constant 0 : index
    %22 = vector.load %arg5[%c0_11, %c0_12] : memref<32x64xf32, #tpu.memory_space<vmem>>, vector<32x64xf32>
    %cst_13 = arith.constant dense<0.000000e+00> : vector<16x64xf32>
    %23 = tpu.matmul %21, %22, %cst_13 {dimension_numbers = #tpu.dot_dimension_numbers<[1], [0], [0], [1], [0, 0, 1, 1], [], []>} : vector<16x32xf32>, vector<32x64xf32>, vector<16x64xf32> -> vector<16x64xf32>
    %c0_14 = arith.constant 0 : index
    %c0_15 = arith.constant 0 : index
    %24 = vector.load %arg6[%c0_14, %c0_15] : memref<1x64xf32, #tpu.memory_space<vmem>>, vector<1x64xf32>
    %25 = vector.broadcast %24 : vector<1x64xf32> to vector<16x64xf32>
    %26 = arith.addf %23, %25 : vector<16x64xf32>
    %27 = vector.extract_strided_slice %26 {offsets = [0, 0], sizes = [16, 32], strides = [1, 1]} : vector<16x64xf32> to vector<16x32xf32>
    %28 = arith.negf %27 : vector<16x32xf32>
    %29 = math.exp %28 : vector<16x32xf32>
    %cst_16 = arith.constant 1.000000e+00 : f32
    %30 = vector.broadcast %cst_16 : f32 to vector<16x32xf32>
    %31 = arith.addf %30, %29 : vector<16x32xf32>
    %32 = arith.divf %30, %31 : vector<16x32xf32>
    %33 = vector.extract_strided_slice %26 {offsets = [0, 32], sizes = [16, 32], strides = [1, 1]} : vector<16x64xf32> to vector<16x32xf32>
    %cst_17 = arith.constant 0.000000e+00 : f32
    %34 = vector.broadcast %cst_17 : f32 to vector<16x32xf32>
    %35 = arith.maximumf %33, %34 : vector<16x32xf32>
    %36 = arith.mulf %32, %35 : vector<16x32xf32>
    %cst_18 = arith.constant 1.000000e+00 : f32
    %37 = vector.broadcast %cst_18 : f32 to vector<16x32xf32>
    %38 = arith.subf %37, %32 : vector<16x32xf32>
    %39 = arith.mulf %38, %21 : vector<16x32xf32>
    %40 = arith.addf %36, %39 : vector<16x32xf32>
    %c0_19 = arith.constant 0 : index
    %c0_20 = arith.constant 0 : index
    %41 = vector.load %arg7[%c0_19, %c0_20] : memref<16x32xf32, #tpu.memory_space<vmem>>, vector<16x32xf32>
    tpu.vector_store %arg7[%c0_19, %c0_20], %40 {strides = array<i32>} : memref<16x32xf32, #tpu.memory_space<vmem>>, vector<16x32xf32>,
    return
  }
  func.func @transform_0(%arg0: i32) -> (i32, i32) {
    %c0_i32 = arith.constant 0 : i32
    %c0_i32_0 = arith.constant 0 : i32
    return %arg0, %c0_i32 : i32, i32
  }
  func.func @transform_1(%arg0: i32) -> (i32, i32) {
    %c0_i32 = arith.constant 0 : i32
    %c0_i32_0 = arith.constant 0 : i32
    %c0_i32_1 = arith.constant 0 : i32
    return %c0_i32, %c0_i32_0 : i32, i32
  }
  func.func @transform_2(%arg0: i32) -> (i32, i32) {
    %c0_i32 = arith.constant 0 : i32
    %c0_i32_0 = arith.constant 0 : i32
    %c0_i32_1 = arith.constant 0 : i32
    return %c0_i32, %c0_i32_0 : i32, i32
  }
  func.func @transform_3(%arg0: i32) -> (i32, i32) {
    %c0_i32 = arith.constant 0 : i32
    %c0_i32_0 = arith.constant 0 : i32
    %c0_i32_1 = arith.constant 0 : i32
    return %c0_i32, %c0_i32_0 : i32, i32
  }
  func.func @transform_4(%arg0: i32) -> (i32, i32) {
    %c0_i32 = arith.constant 0 : i32
    %c0_i32_0 = arith.constant 0 : i32
    %c0_i32_1 = arith.constant 0 : i32
    return %c0_i32, %c0_i32_0 : i32, i32
  }
  func.func @transform_5(%arg0: i32) -> (i32, i32) {
    %c0_i32 = arith.constant 0 : i32
    %c0_i32_0 = arith.constant 0 : i32
    %c0_i32_1 = arith.constant 0 : i32
    return %c0_i32, %c0_i32_0 : i32, i32
  }
  func.func @transform_6(%arg0: i32) -> (i32, i32) {
    %c0_i32 = arith.constant 0 : i32
    %c0_i32_0 = arith.constant 0 : i32
    return %arg0, %c0_i32 : i32, i32
  }
}

</mosaic_0001>

<llo_original>
// kernel: embedding_forward.2
$region0: #{embedding_forward.2}
  #allocation0 [shape = 'u32[]', space=smem, size = 0x4, offset = 0x4, fixed_abs, tag = 'smem constant byte address 0x4 - core index']
  #allocation1 [shape = 'u32[144,128]{1,0:T(1,128)}', space=vmem, size = 0x12000, scoped, tag = 'internal scratch']
  %s0 = inlined_call_operand.vmem [shape: f32[64,32], index: 0, kind: input, shape index: {}]
  %s1 = inlined_call_operand.vmem [shape: f32[32,64], index: 1, kind: input, shape index: {}]
  %s2 = inlined_call_operand.vmem [shape: f32[1,64], index: 2, kind: input, shape index: {}]
  %s3 = inlined_call_operand.vmem [shape: f32[32,64], index: 3, kind: input, shape index: {}]
  %s4 = inlined_call_operand.vmem [shape: f32[1,64], index: 4, kind: input, shape index: {}]
  %s5 = inlined_call_operand.vmem [shape: f32[16,64], index: 5, kind: input, shape index: {}]
  %s6 = inlined_call_operand.<no memory space> [shape: f32[], index: 6, kind: input, shape index: {}]
  %s7 = inlined_call_operand.vmem [shape: pred[16], index: 7, kind: input, shape index: {}]
  %s8 = inlined_call_operand.hbm [shape: f32[16,32], index: 8, kind: output, shape index: {}]
  %s9 = sld [smem:[#allocation0]]
  $region38: #{embedding_forward.2} parent=0
    _
  %s11 = ssub.s32 1, %s9
  %s12 = scalar_select 0, %s11, %s9
  %v13 = vstv %s6
  $region1: #{embedding_forward.2} parent=0
    #allocation2 [shape = 'u8[8192]{0}', space=vmem, size = 0x2000, scoped, tag = 'output window, operand 0, single buffered']
    #allocation3 [shape = 's32[1]{0}', space=sflag, size = 0x4, scoped, tag = 'scoped memory for embedding_forward.2']
    #allocation4 [shape = 'u8[8192]{0}', space=vmem, size = 0x2000, dematerialized = true, scoped, tag = 'FusionAdapter Buffer %fusion.1 = f32[16,64]{1,0:T(8,128)} fusion(%param_5.2, %param_6.1, %param_7.2), kind=kLoop, calls=%fused_computation.2.clone, metadata={op_name="jit(embedding_forward)/jit(_take)/select_n" stack_frame_id=8}']
    %14 = vsyncpa [#allocation3], 0
    // Predicated region
    $region2: #{embedding_forward.2} parent=1 // pred_check
      _
    $region3: #{embedding_forward.2} parent=1 // pred_check_branch
      %16 = sbr.rel (0) target = $region5
    $region4: #{embedding_forward.2} parent=1 // pred_region
      _
    $region5: #{embedding_forward.2} parent=1 // pred_fallthru
      _
    // Predicated region
    $region6: #{embedding_forward.2} parent=1 // pred_check
      _
    $region7: #{embedding_forward.2} parent=1 // pred_check_branch
      %18 = sbr.rel (0) target = $region9
    $region8: #{embedding_forward.2} parent=1 // pred_region
      _
    $region9: #{embedding_forward.2} parent=1 // pred_fallthru
      _
    // Predicated region
    $region10: #{embedding_forward.2} parent=1 // pred_check
      _
    $region11: #{embedding_forward.2} parent=1 // pred_check_branch
      %20 = sbr.rel (0) target = $region13
    $region12: #{embedding_forward.2} parent=1 // pred_region
      _
    $region13: #{embedding_forward.2} parent=1 // pred_fallthru
      _
    // Predicated region
    $region14: #{embedding_forward.2} parent=1 // pred_check
      _
    $region15: #{embedding_forward.2} parent=1 // pred_check_branch
      %22 = sbr.rel (0) target = $region17
    $region16: #{embedding_forward.2} parent=1 // pred_region
      _
    $region17: #{embedding_forward.2} parent=1 // pred_fallthru
      _
    // Predicated region
    $region18: #{embedding_forward.2} parent=1 // pred_check
      _
    $region19: #{embedding_forward.2} parent=1 // pred_check_branch
      %24 = sbr.rel (0) target = $region21
    $region20: #{embedding_forward.2} parent=1 // pred_region
      _
    $region21: #{embedding_forward.2} parent=1 // pred_fallthru
      _
    // Predicated region
    $region22: #{embedding_forward.2} parent=1 // pred_check
      _
    $region23: #{embedding_forward.2} parent=1 // pred_check_branch
      %26 = sbr.rel (0) target = $region25
    $region24: #{embedding_forward.2} parent=1 // pred_region
      _
    $region25: #{embedding_forward.2} parent=1 // pred_fallthru
      _
    // Predicated region
    $region26: #{embedding_forward.2} parent=1 // pred_check
      _
    $region27: #{embedding_forward.2} parent=1 // pred_check_branch
      %28 = sbr.rel (0) target = $region29
    $region28: #{embedding_forward.2} parent=1 // pred_region
      _
    $region29: #{embedding_forward.2} parent=1 // pred_fallthru
      _
    %v29 = vld [vmem:[%s5] sm:$0xff]
    %v30 = vld [vmem:[%s7] ss:$0 sm:$0xff]
    %v32 = vshra.s32 %v30, 0
    %v33 = vand.u32 %v32, 255
    %35 = vbcast.lane.b32.xlu0 %v33, 256
    %v36 = vpop.permute.xlu0 %35
    %37 = xla_tuple %v36, %v29, %v13
    %38 = xla_tuple %37
    %vm39 = vcmp.ne.s32.totalorder %v36, 0
    %v40 = vsel %vm39, %v29, %v13
    %41 = xla_tuple %v40
    %43 = vst [vmem:[#allocation4] sm:$0xff] %v40
    %s44 = scalar_lea.vmem %s5, 8
    %v45 = vld [vmem:[%s44] sm:$0xff]
    %v46 = vld [vmem:[%s7] ss:$0 sm:$0xff]
    %v48 = vshra.s32 %v46, 0
    %v49 = vand.u32 %v48, 255
    %s51 = sor.u32 256, 8
    %52 = vbcast.lane.b32.xlu0 %v49, %s51
    %v53 = vpop.permute.xlu0 %52
    %54 = xla_tuple %v53, %v45, %v13
    %55 = xla_tuple %54
    %vm56 = vcmp.ne.s32.totalorder %v53, 0
    %v57 = vsel %vm56, %v45, %v13
    %58 = xla_tuple %v57
    %s59 = scalar_lea.vmem [#allocation4], 8
    %61 = vst [vmem:[%s59] sm:$0xff] %v57
    %v62 = vld [vmem:[#allocation4] sm:$0xff]
    %v63 = vld [vmem:[#allocation4 + $0x8] sm:$0xff]
    %v64 = vld [vmem:[%s0] sm:$0xff]
    %v65 = vld [vmem:[%s0 + $0x8] sm:$0xff]
    %v66 = vld [vmem:[%s0 + $0x10] sm:$0xff]
    %v67 = vld [vmem:[%s0 + $0x18] sm:$0xff]
    %v68 = vld [vmem:[%s0 + $0x20] sm:$0xff]
    %v69 = vld [vmem:[%s0 + $0x28] sm:$0xff]
    %v70 = vld [vmem:[%s0 + $0x30] sm:$0xff]
    %v71 = vld [vmem:[%s0 + $0x38] sm:$0xff]
    %vm72 = vcmask 523264
    %v74 = vsel %vm72, %v62, 0
    %v77 = vsel %vm72, %v63, 0
    %79 = vmatprep.subr.mxu0 0.0
    %80 = vmatpush1.msra.mxu0 %v64
    %81 = vmatprep.subr.mxu0 0.0
    %82 = vmatpush1.msra.mxu0 %v65
    %83 = vmatprep.subr.mxu0 0.0
    %84 = vmatpush1.msra.mxu0 %v66
    %85 = vmatprep.subr.mxu0 0.0
    %86 = vmatpush1.msra.mxu0 %v67
    %87 = vmatprep.subr.mxu0 0.0
    %88 = vmatpush1.msra.mxu0 %v68
    %89 = vmatprep.subr.mxu0 0.0
    %90 = vmatpush1.msra.mxu0 %v69
    %91 = vmatprep.subr.mxu0 0.0
    %92 = vmatpush1.msra.mxu0 %v70
    %93 = vmatprep.subr.mxu0 0.0
    %94 = vmatpush1.msra.mxu0 %v71
    %95 = vmatprep.subr.mxu0 0.0
    %96 = vmatpush1.msra.mxu0 0.0
    %97 = vmatprep.subr.mxu0 0.0
    %98 = vmatpush1.msra.mxu0 0.0
    %99 = vmatprep.subr.mxu0 0.0
    %100 = vmatpush1.msra.mxu0 0.0
    %101 = vmatprep.subr.mxu0 0.0
    %102 = vmatpush1.msra.mxu0 0.0
    %103 = vmatprep.subr.mxu0 0.0
    %104 = vmatpush1.msra.mxu0 0.0
    %105 = vmatprep.subr.mxu0 0.0
    %106 = vmatpush1.msra.mxu0 0.0
    %107 = vmatprep.subr.mxu0 0.0
    %108 = vmatpush1.msra.mxu0 0.0
    %109 = vmatprep.subr.mxu0 0.0
    %110 = vmatpush1.msra.mxu0 0.0
    %111 = vmatprep.subr.mxu0 0.0
    %112 = vmatpush1.msra.mxu0 0.0
    %113 = vmatprep.subr.mxu0 0.0
    %114 = vmatpush1.msra.mxu0 0.0
    %115 = vmatprep.subr.mxu0 0.0
    %116 = vmatpush1.msra.mxu0 0.0
    %117 = vmatprep.subr.mxu0 0.0
    %118 = vmatpush1.msra.mxu0 0.0
    %119 = vmatprep.subr.mxu0 0.0
    %120 = vmatpush1.msra.mxu0 0.0
    %121 = vmatprep.subr.mxu0 0.0
    %122 = vmatpush1.msra.mxu0 0.0
    %123 = vmatprep.subr.mxu0 0.0
    %124 = vmatpush1.msra.mxu0 0.0
    %125 = vmatprep.subr.mxu0 0.0
    %126 = vmatpush1.msra.mxu0 0.0
    %127 = vmatprep.subr.mxu0 0.0
    %128 = vmatpush1.msra.mxu0 0.0
    %129 = vmatprep.subr.mxu0 0.0
    %130 = vmatpush1.msra.mxu0 0.0
    %131 = vmatprep.subr.mxu0 0.0
    %132 = vmatpush1.msra.mxu0 0.0
    %133 = vmatprep.subr.mxu0 0.0
    %134 = vmatpush1.msra.mxu0 0.0
    %135 = vmatprep.subr.mxu0 0.0
    %136 = vmatpush1.msra.mxu0 0.0
    %137 = vmatprep.subr.mxu0 0.0
    %138 = vmatpush1.msra.mxu0 0.0
    %139 = vmatprep.subr.mxu0 0.0
    %140 = vmatpush1.msra.mxu0 0.0
    %141 = vmatprep.subr.mxu0 0.0
    %142 = vmatpush1.msra.mxu0 0.0
    %143 = vmatprep.mubr.f32.mxu0 0.0
    %144 = vmatmul.mubr.f32.gmra.mrb[0].mxu0 %v74
    %v145 = vpop.f32.mrb[0].mxu0
    %v146 = vadd.f32 0.0, %v145
    %v147 = vpop.f32.mrb[0].mxu0
    %148 = vmatprep.mubr.f32.mxu0 0.0
    %149 = vmatmul.mubr.f32.gmra.mrb[0].mxu0 %v77
    %v150 = vpop.f32.mrb[0].mxu0
    %v151 = vadd.f32 0.0, %v150
    %v152 = vpop.f32.mrb[0].mxu0
    %153 = vdwg.mxu0
    %v154 = vld [vmem:[%s1] sm:$0xff]
    %v155 = vld [vmem:[%s1 + $0x8] sm:$0xff]
    %v156 = vld [vmem:[%s1 + $0x10] sm:$0xff]
    %v157 = vld [vmem:[%s1 + $0x18] sm:$0xff]
    %v158 = vld [vmem:[%s2] sm:$0x1]
    %v160 = vlaneseq
    %v161 = vshrl.u32 %v160, 7
    %v162 = vsub.s32 0, %v161
    %v163 = vrot.slane %v158, %v162
    %vm165 = vcmask 261120
    %v167 = vsel %vm165, %v146, 0
    %v170 = vsel %vm165, %v151, 0
    %172 = vmatprep.subr.mxu0 0.0
    %173 = vmatpush1.msra.mxu0 %v154
    %174 = vmatprep.subr.mxu0 0.0
    %175 = vmatpush1.msra.mxu0 %v155
    %176 = vmatprep.subr.mxu0 0.0
    %177 = vmatpush1.msra.mxu0 %v156
    %178 = vmatprep.subr.mxu0 0.0
    %179 = vmatpush1.msra.mxu0 %v157
    %180 = vmatprep.subr.mxu0 0.0
    %181 = vmatpush1.msra.mxu0 0.0
    %182 = vmatprep.subr.mxu0 0.0
    %183 = vmatpush1.msra.mxu0 0.0
    %184 = vmatprep.subr.mxu0 0.0
    %185 = vmatpush1.msra.mxu0 0.0
    %186 = vmatprep.subr.mxu0 0.0
    %187 = vmatpush1.msra.mxu0 0.0
    %188 = vmatprep.subr.mxu0 0.0
    %189 = vmatpush1.msra.mxu0 0.0
    %190 = vmatprep.subr.mxu0 0.0
    %191 = vmatpush1.msra.mxu0 0.0
    %192 = vmatprep.subr.mxu0 0.0
    %193 = vmatpush1.msra.mxu0 0.0
    %194 = vmatprep.subr.mxu0 0.0
    %195 = vmatpush1.msra.mxu0 0.0
    %196 = vmatprep.subr.mxu0 0.0
    %197 = vmatpush1.msra.mxu0 0.0
    %198 = vmatprep.subr.mxu0 0.0
    %199 = vmatpush1.msra.mxu0 0.0
    %200 = vmatprep.subr.mxu0 0.0
    %201 = vmatpush1.msra.mxu0 0.0
    %202 = vmatprep.subr.mxu0 0.0
    %203 = vmatpush1.msra.mxu0 0.0
    %204 = vmatprep.subr.mxu0 0.0
    %205 = vmatpush1.msra.mxu0 0.0
    %206 = vmatprep.subr.mxu0 0.0
    %207 = vmatpush1.msra.mxu0 0.0
    %208 = vmatprep.subr.mxu0 0.0
    %209 = vmatpush1.msra.mxu0 0.0
    %210 = vmatprep.subr.mxu0 0.0
    %211 = vmatpush1.msra.mxu0 0.0
    %212 = vmatprep.subr.mxu0 0.0
    %213 = vmatpush1.msra.mxu0 0.0
    %214 = vmatprep.subr.mxu0 0.0
    %215 = vmatpush1.msra.mxu0 0.0
    %216 = vmatprep.subr.mxu0 0.0
    %217 = vmatpush1.msra.mxu0 0.0
    %218 = vmatprep.subr.mxu0 0.0
    %219 = vmatpush1.msra.mxu0 0.0
    %220 = vmatprep.subr.mxu0 0.0
    %221 = vmatpush1.msra.mxu0 0.0
    %222 = vmatprep.subr.mxu0 0.0
    %223 = vmatpush1.msra.mxu0 0.0
    %224 = vmatprep.subr.mxu0 0.0
    %225 = vmatpush1.msra.mxu0 0.0
    %226 = vmatprep.subr.mxu0 0.0
    %227 = vmatpush1.msra.mxu0 0.0
    %228 = vmatprep.subr.mxu0 0.0
    %229 = vmatpush1.msra.mxu0 0.0
    %230 = vmatprep.subr.mxu0 0.0
    %231 = vmatpush1.msra.mxu0 0.0
    %232 = vmatprep.subr.mxu0 0.0
    %233 = vmatpush1.msra.mxu0 0.0
    %234 = vmatprep.subr.mxu0 0.0
    %235 = vmatpush1.msra.mxu0 0.0
    %236 = vmatprep.mubr.f32.mxu0 0.0
    %237 = vmatmul.mubr.f32.gmra.mrb[0].mxu0 %v167
    %v238 = vpop.f32.mrb[0].mxu0
    %v239 = vadd.f32 %v163, %v238
    %v240 = vpop.f32.mrb[0].mxu0
    %241 = vmatprep.mubr.f32.mxu0 0.0
    %242 = vmatmul.mubr.f32.gmra.mrb[0].mxu0 %v170
    %v243 = vpop.f32.mrb[0].mxu0
    %v244 = vadd.f32 %v163, %v243
    %v245 = vpop.f32.mrb[0].mxu0
    %246 = vdwg.mxu0
    %v247 = vxor.u32 %v239, 2147483648
    %v248 = vxor.u32 %v244, 2147483648
    %v249 = vmul.f32 %v247, 1.442695
    %v250 = vpow.pop %v249
    %v251 = vmul.f32 %v248, 1.442695
    %v252 = vpow.pop %v251
    %v253 = vadd.f32 %v250, 1.0
    %v254 = vadd.f32 %v252, 1.0
    %v255 = vrcp.pop %v253
    %v256 = vmul.f32 1.0, %v255
    %v257 = vrcp.pop %v254
    %v258 = vmul.f32 1.0, %v257
    %v259 = vmax.f32 %v239, 0.0
    %v260 = vmax.f32 %v244, 0.0
    %263 = vrot.lane.b32.xlu0 %v259, 96
    %v264 = vpop.permute.xlu0 %263
    %265 = vrot.lane.b32.xlu0 %v260, 96
    %v266 = vpop.permute.xlu0 %265
    %v269 = vmul.f32 %v256, %v264
    %v270 = vmul.f32 %v258, %v266
    %v271 = vsub.f32 1.0, %v256
    %v272 = vsub.f32 1.0, %v258
    %v273 = vmul.f32 %v271, %v146
    %v274 = vmul.f32 %v272, %v151
    %v275 = vadd.f32 %v269, %v273
    %v276 = vadd.f32 %v270, %v274
    %v277 = vld [vmem:[%s3] sm:$0xff]
    %v278 = vld [vmem:[%s3 + $0x8] sm:$0xff]
    %v279 = vld [vmem:[%s3 + $0x10] sm:$0xff]
    %v280 = vld [vmem:[%s3 + $0x18] sm:$0xff]
    %v281 = vld [vmem:[%s4] sm:$0x1]
    %v283 = vlaneseq
    %v284 = vshrl.u32 %v283, 7
    %v285 = vsub.s32 0, %v284
    %v286 = vrot.slane %v281, %v285
    %v289 = vsel %vm165, %v275, 0
    %v292 = vsel %vm165, %v276, 0
    %294 = vmatprep.subr.mxu0 0.0
    %295 = vmatpush1.msra.mxu0 %v277
    %296 = vmatprep.subr.mxu0 0.0
    %297 = vmatpush1.msra.mxu0 %v278
    %298 = vmatprep.subr.mxu0 0.0
    %299 = vmatpush1.msra.mxu0 %v279
    %300 = vmatprep.subr.mxu0 0.0
    %301 = vmatpush1.msra.mxu0 %v280
    %302 = vmatprep.subr.mxu0 0.0
    %303 = vmatpush1.msra.mxu0 0.0
    %304 = vmatprep.subr.mxu0 0.0
    %305 = vmatpush1.msra.mxu0 0.0
    %306 = vmatprep.subr.mxu0 0.0
    %307 = vmatpush1.msra.mxu0 0.0
    %308 = vmatprep.subr.mxu0 0.0
    %309 = vmatpush1.msra.mxu0 0.0
    %310 = vmatprep.subr.mxu0 0.0
    %311 = vmatpush1.msra.mxu0 0.0
    %312 = vmatprep.subr.mxu0 0.0
    %313 = vmatpush1.msra.mxu0 0.0
    %314 = vmatprep.subr.mxu0 0.0
    %315 = vmatpush1.msra.mxu0 0.0
    %316 = vmatprep.subr.mxu0 0.0
    %317 = vmatpush1.msra.mxu0 0.0
    %318 = vmatprep.subr.mxu0 0.0
    %319 = vmatpush1.msra.mxu0 0.0
    %320 = vmatprep.subr.mxu0 0.0
    %321 = vmatpush1.msra.mxu0 0.0
    %322 = vmatprep.subr.mxu0 0.0
    %323 = vmatpush1.msra.mxu0 0.0
    %324 = vmatprep.subr.mxu0 0.0
    %325 = vmatpush1.msra.mxu0 0.0
    %326 = vmatprep.subr.mxu0 0.0
    %327 = vmatpush1.msra.mxu0 0.0
    %328 = vmatprep.subr.mxu0 0.0
    %329 = vmatpush1.msra.mxu0 0.0
    %330 = vmatprep.subr.mxu0 0.0
    %331 = vmatpush1.msra.mxu0 0.0
    %332 = vmatprep.subr.mxu0 0.0
    %333 = vmatpush1.msra.mxu0 0.0
    %334 = vmatprep.subr.mxu0 0.0
    %335 = vmatpush1.msra.mxu0 0.0
    %336 = vmatprep.subr.mxu0 0.0
    %337 = vmatpush1.msra.mxu0 0.0
    %338 = vmatprep.subr.mxu0 0.0
    %339 = vmatpush1.msra.mxu0 0.0
    %340 = vmatprep.subr.mxu0 0.0
    %341 = vmatpush1.msra.mxu0 0.0
    %342 = vmatprep.subr.mxu0 0.0
    %343 = vmatpush1.msra.mxu0 0.0
    %344 = vmatprep.subr.mxu0 0.0
    %345 = vmatpush1.msra.mxu0 0.0
    %346 = vmatprep.subr.mxu0 0.0
    %347 = vmatpush1.msra.mxu0 0.0
    %348 = vmatprep.subr.mxu0 0.0
    %349 = vmatpush1.msra.mxu0 0.0
    %350 = vmatprep.subr.mxu0 0.0
    %351 = vmatpush1.msra.mxu0 0.0
    %352 = vmatprep.subr.mxu0 0.0
    %353 = vmatpush1.msra.mxu0 0.0
    %354 = vmatprep.subr.mxu0 0.0
    %355 = vmatpush1.msra.mxu0 0.0
    %356 = vmatprep.subr.mxu0 0.0
    %357 = vmatpush1.msra.mxu0 0.0
    %358 = vmatprep.mubr.f32.mxu0 0.0
    %359 = vmatmul.mubr.f32.gmra.mrb[0].mxu0 %v289
    %v360 = vpop.f32.mrb[0].mxu0
    %v361 = vadd.f32 %v286, %v360
    %v362 = vpop.f32.mrb[0].mxu0
    %363 = vmatprep.mubr.f32.mxu0 0.0
    %364 = vmatmul.mubr.f32.gmra.mrb[0].mxu0 %v292
    %v365 = vpop.f32.mrb[0].mxu0
    %v366 = vadd.f32 %v286, %v365
    %v367 = vpop.f32.mrb[0].mxu0
    %368 = vdwg.mxu0
    %v369 = vxor.u32 %v361, 2147483648
    %v370 = vxor.u32 %v366, 2147483648
    %v371 = vmul.f32 %v369, 1.442695
    %v372 = vpow.pop %v371
    %v373 = vmul.f32 %v370, 1.442695
    %v374 = vpow.pop %v373
    %v375 = vadd.f32 %v372, 1.0
    %v376 = vadd.f32 %v374, 1.0
    %v377 = vrcp.pop %v375
    %v378 = vmul.f32 1.0, %v377
    %v379 = vrcp.pop %v376
    %v380 = vmul.f32 1.0, %v379
    %v381 = vmax.f32 %v361, 0.0
    %v382 = vmax.f32 %v366, 0.0
    %385 = vrot.lane.b32.xlu0 %v381, 96
    %v386 = vpop.permute.xlu0 %385
    %387 = vrot.lane.b32.xlu0 %v382, 96
    %v388 = vpop.permute.xlu0 %387
    %v391 = vmul.f32 %v378, %v386
    %v392 = vmul.f32 %v380, %v388
    %v393 = vsub.f32 1.0, %v378
    %v394 = vsub.f32 1.0, %v380
    %v395 = vmul.f32 %v393, %v275
    %v396 = vmul.f32 %v394, %v276
    %v397 = vadd.f32 %v391, %v395
    %v398 = vadd.f32 %v392, %v396
    %399 = vst.msk [vmem:[#allocation2] sm:$0xff] %vm165, %v397
    %400 = vst.msk [vmem:[#allocation2 + $0x8] sm:$0xff] %vm165, %v398
    // Predicated region
    $region30: #{embedding_forward.2} parent=1 // pred_check
      _
    $region31: #{embedding_forward.2} parent=1 // pred_check_branch
      %402 = sbr.rel (0) target = $region33
    $region32: #{embedding_forward.2} parent=1 // pred_region
      %s404 = ssub.s32 256, 256
      %405 = vsyncadd [#allocation3], %s404
      %s406 = sshll.u32 [#allocation2], 4
      %s407 = int_to_ptr.vmem [resolvable:$true] %s406
      %412 = dma.vmem_to_hbm [thread:$0]  %s407, 256, %s8, [#allocation3], 128, 128, 8
    $region33: #{embedding_forward.2} parent=1 // pred_fallthru
      _
    // Predicated region
    $region34: #{embedding_forward.2} parent=1 // pred_check
      _
    $region35: #{embedding_forward.2} parent=1 // pred_check_branch
      %414 = sbr.rel (0) target = $region37
    $region36: #{embedding_forward.2} parent=1 // pred_region
      %415 = dma.done [#allocation3], 256
    $region37: #{embedding_forward.2} parent=1 // pred_fallthru
      _
    %416 = vsyncpa [#allocation3], 1

</llo_original>
